<compile_context>
chip_gen: v7x
topology: tpu7x:2x2x1
jax: 0.10.0
libtpu: 0.0.40
codegen_flags: <defaults>
</compile_context>

<pallas_src>
import functools
import math

import jax
import jax.numpy as jnp
from jax.experimental import pallas as pl
from jax.experimental.pallas import tpu as pltpu

LANE = 128          # lane width (last dim alignment)
BF16_SUBLANE = 16   # native bf16 sublane tile


def _round_up(x, m):
    return ((x + m - 1) // m) * m


def _pad2d_bf16(a, rows, cols):
    r, c = a.shape
    return jnp.pad(a.astype(jnp.bfloat16), ((0, rows - r), (0, cols - c)))


# ----------------------------- Pallas kernels --------------------------------
def _gemm_bias_act_kernel(a_ref, w_ref, b_ref, o_ref, *, negative_slope, apply_act):
    # a_ref: (TM, Kp) bf16, w_ref: (Kp, Cp) bf16, b_ref: (1, Cp) f32,
    # o_ref: (TM, Cp) f32  (Cp is a multiple of 128 -> lane-dense stores)
    acc = jnp.dot(a_ref[...], w_ref[...], preferred_element_type=jnp.float32)
    acc = acc + b_ref[...]
    if apply_act:
        acc = jnp.where(acc >= 0.0, acc, negative_slope * acc)
    o_ref[...] = acc.astype(o_ref.dtype)


def _gemm_act_gemm_kernel(a_ref, w1_ref, b1_ref, w2_ref, b2_ref, o_ref, *, negative_slope):
    # Fused: LeakyReLU(A @ W1 + b1) @ W2 + b2   (trailing 1x1 conv fusion).
    h = jnp.dot(a_ref[...], w1_ref[...], preferred_element_type=jnp.float32)
    h = h + b1_ref[...]
    h = jnp.where(h >= 0.0, h, negative_slope * h)
    out = jnp.dot(h.astype(jnp.bfloat16), w2_ref[...], preferred_element_type=jnp.float32)
    out = out + b2_ref[...]
    o_ref[...] = out.astype(o_ref.dtype)


# ----------------------------- Pallas wrappers --------------------------------
def _launch(kernel, a_p, weights_and_biases, M_pad, tm_eff, C_out_pad):
    """Common pallas_call plumbing: grid over M only, weights/bias resident."""
    grid = (M_pad // tm_eff,)
    in_specs = [pl.BlockSpec((tm_eff, a_p.shape[1]), lambda i: (i, 0))]
    for arr in weights_and_biases:
        r, c = arr.shape
        in_specs.append(pl.BlockSpec((r, c), lambda i: (0, 0)))
    sem = ("parallel",) if grid[0] >= 4 else ("arbitrary",)
    return pl.pallas_call(
        kernel,
        out_shape=jax.ShapeDtypeStruct((M_pad, C_out_pad), jnp.float32),
        grid_spec=pltpu.PrefetchScalarGridSpec(
            num_scalar_prefetch=0,
            grid=grid,
            in_specs=in_specs,
            out_specs=pl.BlockSpec((tm_eff, C_out_pad), lambda i: (i, 0)),
        ),
        compiler_params=pltpu.CompilerParams(
            dimension_semantics=sem,
            vmem_limit_bytes=32 * 1024 * 1024,
        ),
    )(a_p, *weights_and_biases)


def gemm_bias_act(a, w, b, *, apply_act, negative_slope=0.01, tm=512):
    """a: (M, K) f32, w: (K, Cout) f32, b: (Cout,) f32 -> (M, Cout) f32."""
    M, K = a.shape
    Cout = w.shape[1]
    K_pad = _round_up(K, LANE)
    C_pad = _round_up(Cout, LANE)
    tm_eff = min(tm, _round_up(M, BF16_SUBLANE))
    M_pad = _round_up(M, tm_eff)

    a_p = _pad2d_bf16(a, M_pad, K_pad)
    w_p = _pad2d_bf16(w, K_pad, C_pad)
    b_p = jnp.pad(b.astype(jnp.float32), (0, C_pad - Cout)).reshape(1, C_pad)

    kernel = functools.partial(_gemm_bias_act_kernel,
                               negative_slope=negative_slope, apply_act=apply_act)
    out = _launch(kernel, a_p, [w_p, b_p], M_pad, tm_eff, C_pad)
    return out[:M, :Cout]


def gemm_act_gemm_bias(a, w1, b1, w2, b2, *, negative_slope=0.01, tm=512):
    """LeakyReLU(a @ w1 + b1) @ w2 + b2.  a: (M,K1), w1: (K1,C1), w2: (C1,C2)."""
    M, K1 = a.shape
    C1 = w1.shape[1]
    C2 = w2.shape[1]
    K_pad = _round_up(K1, LANE)
    C1_pad = _round_up(C1, LANE)
    C2_pad = _round_up(C2, LANE)
    tm_eff = min(tm, _round_up(M, BF16_SUBLANE))
    M_pad = _round_up(M, tm_eff)

    a_p = _pad2d_bf16(a, M_pad, K_pad)
    w1_p = _pad2d_bf16(w1, K_pad, C1_pad)
    b1_p = jnp.pad(b1.astype(jnp.float32), (0, C1_pad - C1)).reshape(1, C1_pad)
    w2_p = _pad2d_bf16(w2, C1_pad, C2_pad)
    b2_p = jnp.pad(b2.astype(jnp.float32), (0, C2_pad - C2)).reshape(1, C2_pad)

    kernel = functools.partial(_gemm_act_gemm_kernel, negative_slope=negative_slope)
    out = _launch(kernel, a_p, [w1_p, b1_p, w2_p, b2_p], M_pad, tm_eff, C2_pad)
    return out[:M, :C2]


# ------------------------------ im2col glue ---------------------------------
def im2col_3d(x, k, stride, pad):
    """x: (N, C, D, H, W) -> patches (N*Do*Ho*Wo, C*k^3), plus out spatial dims."""
    if pad > 0:
        x = jnp.pad(x, ((0, 0), (0, 0), (pad, pad), (pad, pad), (pad, pad)))
    N, C, D, H, W = x.shape
    Do = (D - k) // stride + 1
    Ho = (H - k) // stride + 1
    Wo = (W - k) // stride + 1
    patches = []
    for kd in range(k):
        for kh in range(k):
            for kw in range(k):
                sl = x[
                    :,
                    :,
                    kd: kd + stride * Do: stride,
                    kh: kh + stride * Ho: stride,
                    kw: kw + stride * Wo: stride,
                ]  # (N, C, Do, Ho, Wo)
                patches.append(sl)
    p = jnp.stack(patches, axis=2)            # (N, C, k^3, Do, Ho, Wo)
    p = p.transpose(0, 3, 4, 5, 1, 2)         # (N, Do, Ho, Wo, C, k^3)
    p = p.reshape(N * Do * Ho * Wo, C * k * k * k)
    return p, (N, Do, Ho, Wo)


def conv3d_pallas(x, weight, bias, stride, pad, *, apply_act, negative_slope=0.01):
    """PyTorch-semantics Conv3d (NCDHW, weight (Cout,Cin,k,k,k)) via im2col + Pallas GEMM."""
    Cout, Cin, k, _, _ = weight.shape
    patches, (N, Do, Ho, Wo) = im2col_3d(x, k, stride, pad)
    w2 = weight.reshape(Cout, Cin * k * k * k).T       # (K, Cout), matches patch col order
    out = gemm_bias_act(patches, w2, bias,
                        apply_act=apply_act, negative_slope=negative_slope)
    return out.reshape(N, Do, Ho, Wo, Cout).transpose(0, 4, 1, 2, 3)  # back to NCDHW


def conv3d_fused_1x1_pallas(x, w1, b1, stride, pad, w2, b2, *, negative_slope=0.01):
    """Conv3d(w1, stride, pad) + LeakyReLU + Conv3d(w2, 1x1, no act), one pallas_call."""
    C1, Cin, k, _, _ = w1.shape
    C2 = w2.shape[0]
    assert w2.shape[2:] == (1, 1, 1)
    patches, (N, Do, Ho, Wo) = im2col_3d(x, k, stride, pad)
    w1m = w1.reshape(C1, Cin * k * k * k).T            # (K1, C1)
    w2m = w2.reshape(C2, C1).T                         # (C1, C2)
    out = gemm_act_gemm_bias(patches, w1m, b1, w2m, b2, negative_slope=negative_slope)
    return out.reshape(N, Do, Ho, Wo, C2).transpose(0, 4, 1, 2, 3)


# ------------------------------ OriEncoder -----------------------------------
def init_ori_encoder_params(key, n_layers, min_cha, max_cha):
    """Deterministic init mirroring PyTorch Conv3d default bounds."""
    layers = []
    cha = min_cha

    def make_conv(key, cin, cout, k):
        kw_, kb_ = jax.random.split(key)
        fan_in = cin * k * k * k
        bound = 1.0 / math.sqrt(fan_in)
        w = jax.random.uniform(kw_, (cout, cin, k, k, k), jnp.float32, -bound, bound)
        b = jax.random.uniform(kb_, (cout,), jnp.float32, -bound, bound)
        return w, b

    keys = jax.random.split(key, n_layers + 2)
    # Conv3d(3, cha, 3, stride=2, pad=0) + LeakyReLU
    w, b = make_conv(keys[0], 3, cha, 3)
    layers.append(dict(weight=w, bias=b, stride=2, pad=0, act=True))
    # n_layers x [Conv3d(cha, min(2cha,max), 3, stride=2, pad=1) + LeakyReLU]
    for i in range(n_layers):
        nxt = min(2 * cha, max_cha)
        w, b = make_conv(keys[1 + i], cha, nxt, 3)
        layers.append(dict(weight=w, bias=b, stride=2, pad=1, act=True))
        cha = nxt
    # Conv3d(cha, min(2cha,max), 1) -- no activation after it
    nxt = min(2 * cha, max_cha)
    w, b = make_conv(keys[-1], cha, nxt, 1)
    layers.append(dict(weight=w, bias=b, stride=1, pad=0, act=False))
    return layers


def ori_encoder_forward(params, x):
    out = x
    # All layers except the final (strided conv + 1x1 conv) pair.
    for layer in params[:-2]:
        out = conv3d_pallas(out, layer["weight"], layer["bias"],
                            layer["stride"], layer["pad"],
                            apply_act=layer["act"], negative_slope=0.01)
    # Fuse the last LeakyReLU conv with the trailing 1x1 projection.
    l1, l2 = params[-2], params[-1]
    out = conv3d_fused_1x1_pallas(out, l1["weight"], l1["bias"],
                                  l1["stride"], l1["pad"],
                                  l2["weight"], l2["bias"], negative_slope=0.01)
    return out


# --------------------------------- main --------------------------------------
if __name__ == "__main__":
    key = jax.random.PRNGKey(0)
    k_param, k_x = jax.random.split(key)

    n_layers, min_cha, max_cha = 2, 4, 16
    params = init_ori_encoder_params(k_param, n_layers, min_cha, max_cha)

    # Small NCDHW input: (N=2, C=3, D=H=W=9)
    x = jax.random.normal(k_x, (2, 3, 9, 9, 9), dtype=jnp.float32)

    y = ori_encoder_forward(params, x)
    y = jax.block_until_ready(y)
    assert y.shape == (2, 16, 1, 1, 1), y.shape
    assert bool(jnp.all(jnp.isfinite(y)))
    print("KERNEL_OK")
</pallas_src>

<mosaic_0001>
module attributes {stable_mosaic.version = 11 : i64} {
  func.func @_gemm_bias_act_kernel(%arg0: i32, %arg1: memref<128x128xbf16, #tpu.memory_space<vmem>>, %arg2: memref<128x128xbf16, #tpu.memory_space<vmem>>, %arg3: memref<1x128xf32, #tpu.memory_space<vmem>>, %arg4: memref<128x128xf32, #tpu.memory_space<vmem>>) attributes {dimension_semantics = [#tpu.dimension_semantics<arbitrary>], iteration_bounds = array<i64: 1>, scalar_prefetch = 0 : i64, scratch_operands = 0 : i64, tpu.core_type = #tpu.core_type<tc>, window_params = [{transform_indices = @transform_0, window_bounds = array<i64: 128, 128>}, {pipeline_mode = #tpu.pipeline_mode<synchronous>, transform_indices = @transform_1, window_bounds = array<i64: 128, 128>}, {pipeline_mode = #tpu.pipeline_mode<synchronous>, transform_indices = @transform_2, window_bounds = array<i64: 1, 128>}, {transform_indices = @transform_3, window_bounds = array<i64: 128, 128>}]} {
    %c0 = arith.constant 0 : index
    %c0_0 = arith.constant 0 : index
    %0 = vector.load %arg1[%c0, %c0_0] : memref<128x128xbf16, #tpu.memory_space<vmem>>, vector<128x128xbf16>
    %c0_1 = arith.constant 0 : index
    %c0_2 = arith.constant 0 : index
    %1 = vector.load %arg2[%c0_1, %c0_2] : memref<128x128xbf16, #tpu.memory_space<vmem>>, vector<128x128xbf16>
    %cst = arith.constant dense<0.000000e+00> : vector<128x128xf32>
    %2 = tpu.matmul %0, %1, %cst {dimension_numbers = #tpu.dot_dimension_numbers<[1], [0], [0], [1], [0, 0, 1, 1], [], []>} : vector<128x128xbf16>, vector<128x128xbf16>, vector<128x128xf32> -> vector<128x128xf32>
    %c0_3 = arith.constant 0 : index
    %c0_4 = arith.constant 0 : index
    %3 = vector.load %arg3[%c0_3, %c0_4] : memref<1x128xf32, #tpu.memory_space<vmem>>, vector<1x128xf32>
    %4 = vector.broadcast %3 : vector<1x128xf32> to vector<128x128xf32>
    %5 = arith.addf %2, %4 : vector<128x128xf32>
    %cst_5 = arith.constant 0.000000e+00 : f32
    %6 = vector.broadcast %cst_5 : f32 to vector<128x128xf32>
    %7 = arith.cmpf oge, %5, %6 : vector<128x128xf32>
    %cst_6 = arith.constant 0.00999999977 : f32
    %8 = vector.broadcast %cst_6 : f32 to vector<128x128xf32>
    %9 = arith.mulf %8, %5 : vector<128x128xf32>
    %10 = arith.select %7, %5, %9 : vector<128x128xi1>, vector<128x128xf32>
    %c0_7 = arith.constant 0 : index
    %c0_8 = arith.constant 0 : index
    %11 = vector.load %arg4[%c0_7, %c0_8] : memref<128x128xf32, #tpu.memory_space<vmem>>, vector<128x128xf32>
    tpu.vector_store %arg4[%c0_7, %c0_8], %10 {strides = array<i32>} : memref<128x128xf32, #tpu.memory_space<vmem>>, vector<128x128xf32>,
    return
  }
  func.func @transform_0(%arg0: i32) -> (i32, i32) {
    %c0_i32 = arith.constant 0 : i32
    %c0_i32_0 = arith.constant 0 : i32
    return %arg0, %c0_i32 : i32, i32
  }
  func.func @transform_1(%arg0: i32) -> (i32, i32) {
    %c0_i32 = arith.constant 0 : i32
    %c0_i32_0 = arith.constant 0 : i32
    %c0_i32_1 = arith.constant 0 : i32
    return %c0_i32, %c0_i32_0 : i32, i32
  }
  func.func @transform_2(%arg0: i32) -> (i32, i32) {
    %c0_i32 = arith.constant 0 : i32
    %c0_i32_0 = arith.constant 0 : i32
    %c0_i32_1 = arith.constant 0 : i32
    return %c0_i32, %c0_i32_0 : i32, i32
  }
  func.func @transform_3(%arg0: i32) -> (i32, i32) {
    %c0_i32 = arith.constant 0 : i32
    %c0_i32_0 = arith.constant 0 : i32
    return %arg0, %c0_i32 : i32, i32
  }
}

</mosaic_0001>

<llo_original>
// kernel: tpu_custom_call.1
$region0: #{tpu_custom_call.1}
  #allocation0 [shape = 'u32[]', space=smem, size = 0x4, offset = 0x4, fixed_abs, tag = 'smem constant byte address 0x4 - core index']
  #allocation1 [shape = 'u32[144,128]{1,0:T(1,128)}', space=vmem, size = 0x12000, scoped, tag = 'internal scratch']
  %s0 = inlined_call_operand.hbm [shape: bf16[128,128], index: 0, kind: input, shape index: {}]
  %s1 = inlined_call_operand.hbm [shape: bf16[128,128], index: 1, kind: input, shape index: {}]
  %s2 = inlined_call_operand.vmem [shape: f32[1,128], index: 2, kind: input, shape index: {}]
  %s3 = inlined_call_operand.hbm [shape: f32[128,128], index: 3, kind: output, shape index: {}]
  %s4 = sld [smem:[#allocation0]]
  $region30: #{tpu_custom_call.1} parent=0
    _
  %s6 = ssub.s32 1, %s4
  %s7 = scalar_select 0, %s6, %s4
  $region1: #{tpu_custom_call.1} parent=0
    #allocation2 [shape = 'u8[32768]{0}', space=vmem, size = 0x8000, scoped, tag = 'input window, operand 0, single buffered']
    #allocation3 [shape = 's32[1]{0}', space=sflag, size = 0x4, scoped, tag = 'scoped memory for tpu_custom_call.1']
    #allocation4 [shape = 's32[1]{0}', space=sflag, size = 0x4, scoped, tag = 'scoped memory for tpu_custom_call.1']
    #allocation5 [shape = 'u8[32768]{0}', space=vmem, size = 0x8000, scoped, tag = 'input window, operand 1, single buffered']
    #allocation6 [shape = 's32[1]{0}', space=sflag, size = 0x4, scoped, tag = 'scoped memory for tpu_custom_call.1']
    #allocation7 [shape = 'u8[65536]{0}', space=vmem, size = 0x10000, scoped, tag = 'output window, operand 0, single buffered']
    %8 = vsyncpa [#allocation3], 0
    %9 = vsyncpa [#allocation6], 0
    %10 = vsyncpa [#allocation4], 0
    // Predicated region
    $region2: #{tpu_custom_call.1} parent=1 // pred_check
      _
    $region3: #{tpu_custom_call.1} parent=1 // pred_check_branch
      %12 = sbr.rel (0) target = $region5
    $region4: #{tpu_custom_call.1} parent=1 // pred_region
      %s14 = ssub.s32 1024, 1024
      %15 = vsyncadd [#allocation3], %s14
      %s16 = sshll.u32 [#allocation2], 4
      %s17 = int_to_ptr.vmem [resolvable:$true] %s16
      %22 = dma.hbm_to_vmem [thread:$0]  %s0, 1024, %s17, [#allocation3], 64, 64, 4
    $region5: #{tpu_custom_call.1} parent=1 // pred_fallthru
      _
    // Predicated region
    $region6: #{tpu_custom_call.1} parent=1 // pred_check
      _
    $region7: #{tpu_custom_call.1} parent=1 // pred_check_branch
      %24 = sbr.rel (0) target = $region9
    $region8: #{tpu_custom_call.1} parent=1 // pred_region
      %s26 = ssub.s32 1024, 1024
      %27 = vsyncadd [#allocation6], %s26
      %s28 = sshll.u32 [#allocation5], 4
      %s29 = int_to_ptr.vmem [resolvable:$true] %s28
      %34 = dma.hbm_to_vmem [thread:$0]  %s1, 1024, %s29, [#allocation6], 64, 64, 4
    $region9: #{tpu_custom_call.1} parent=1 // pred_fallthru
      _
    // Predicated region
    $region10: #{tpu_custom_call.1} parent=1 // pred_check
      _
    $region11: #{tpu_custom_call.1} parent=1 // pred_check_branch
      %36 = sbr.rel (0) target = $region13
    $region12: #{tpu_custom_call.1} parent=1 // pred_region
      _
    $region13: #{tpu_custom_call.1} parent=1 // pred_fallthru
      _
    // Predicated region
    $region14: #{tpu_custom_call.1} parent=1 // pred_check
      _
    $region15: #{tpu_custom_call.1} parent=1 // pred_check_branch
      %38 = sbr.rel (0) target = $region17
    $region16: #{tpu_custom_call.1} parent=1 // pred_region
      %39 = dma.done [#allocation3], 1024
    $region17: #{tpu_custom_call.1} parent=1 // pred_fallthru
      _
    // Predicated region
    $region18: #{tpu_custom_call.1} parent=1 // pred_check
      _
    $region19: #{tpu_custom_call.1} parent=1 // pred_check_branch
      %41 = sbr.rel (0) target = $region21
    $region20: #{tpu_custom_call.1} parent=1 // pred_region
      %42 = dma.done [#allocation6], 1024
    $region21: #{tpu_custom_call.1} parent=1 // pred_fallthru
      _
    %v44 = vld [vmem:[#allocation2] sm:$0xf]
    %v45 = vld [vmem:[#allocation2 + $0x4] sm:$0xf]
    %v46 = vld [vmem:[#allocation2 + $0x8] sm:$0xf]
    %v47 = vld [vmem:[#allocation2 + $0xc] sm:$0xf]
    %v48 = vld [vmem:[#allocation2 + $0x10] sm:$0xf]
    %v49 = vld [vmem:[#allocation2 + $0x14] sm:$0xf]
    %v50 = vld [vmem:[#allocation2 + $0x18] sm:$0xf]
    %v51 = vld [vmem:[#allocation2 + $0x1c] sm:$0xf]
    %v52 = vld [vmem:[#allocation2 + $0x20] sm:$0xf]
    %v53 = vld [vmem:[#allocation2 + $0x24] sm:$0xf]
    %v54 = vld [vmem:[#allocation2 + $0x28] sm:$0xf]
    %v55 = vld [vmem:[#allocation2 + $0x2c] sm:$0xf]
    %v56 = vld [vmem:[#allocation2 + $0x30] sm:$0xf]
    %v57 = vld [vmem:[#allocation2 + $0x34] sm:$0xf]
    %v58 = vld [vmem:[#allocation2 + $0x38] sm:$0xf]
    %v59 = vld [vmem:[#allocation2 + $0x3c] sm:$0xf]
    %v60 = vld [vmem:[#allocation5] sm:$0xf]
    %v61 = vld [vmem:[#allocation5 + $0x4] sm:$0xf]
    %v62 = vld [vmem:[#allocation5 + $0x8] sm:$0xf]
    %v63 = vld [vmem:[#allocation5 + $0xc] sm:$0xf]
    %v64 = vld [vmem:[#allocation5 + $0x10] sm:$0xf]
    %v65 = vld [vmem:[#allocation5 + $0x14] sm:$0xf]
    %v66 = vld [vmem:[#allocation5 + $0x18] sm:$0xf]
    %v67 = vld [vmem:[#allocation5 + $0x1c] sm:$0xf]
    %v68 = vld [vmem:[#allocation5 + $0x20] sm:$0xf]
    %v69 = vld [vmem:[#allocation5 + $0x24] sm:$0xf]
    %v70 = vld [vmem:[#allocation5 + $0x28] sm:$0xf]
    %v71 = vld [vmem:[#allocation5 + $0x2c] sm:$0xf]
    %v72 = vld [vmem:[#allocation5 + $0x30] sm:$0xf]
    %v73 = vld [vmem:[#allocation5 + $0x34] sm:$0xf]
    %v74 = vld [vmem:[#allocation5 + $0x38] sm:$0xf]
    %v75 = vld [vmem:[#allocation5 + $0x3c] sm:$0xf]
    %v76 = vld [vmem:[%s2] sm:$0x1]
    %v78 = vlaneseq
    %v79 = vshrl.u32 %v78, 7
    %v80 = vsub.s32 0, %v79
    %v81 = vrot.slane %v76, %v80
    %v99 = vunpack.c.l.b16 %v44
    %v100 = vunpack.c.l.b16 %v45
    %v101 = vunpack.c.l.b16 %v46
    %v102 = vunpack.c.l.b16 %v47
    %v103 = vunpack.c.l.b16 %v48
    %v104 = vunpack.c.l.b16 %v49
    %v105 = vunpack.c.l.b16 %v50
    %v106 = vunpack.c.l.b16 %v51
    %v107 = vunpack.c.l.b16 %v52
    %v108 = vunpack.c.l.b16 %v53
    %v109 = vunpack.c.l.b16 %v54
    %v110 = vunpack.c.l.b16 %v55
    %v111 = vunpack.c.l.b16 %v56
    %v112 = vunpack.c.l.b16 %v57
    %v113 = vunpack.c.l.b16 %v58
    %v114 = vunpack.c.l.b16 %v59
    %v115 = vpack.c.b16 %v100, %v99
    %v116 = vpack.c.b16 %v102, %v101
    %v117 = vpack.c.b16 %v104, %v103
    %v118 = vpack.c.b16 %v106, %v105
    %v119 = vpack.c.b16 %v108, %v107
    %v120 = vpack.c.b16 %v110, %v109
    %v121 = vpack.c.b16 %v112, %v111
    %v122 = vpack.c.b16 %v114, %v113
    %v147 = vunpack.c.l.b16 %v60
    %v148 = vunpack.c.l.b16 %v61
    %v149 = vunpack.c.l.b16 %v62
    %v150 = vunpack.c.l.b16 %v63
    %v151 = vunpack.c.l.b16 %v64
    %v152 = vunpack.c.l.b16 %v65
    %v153 = vunpack.c.l.b16 %v66
    %v154 = vunpack.c.l.b16 %v67
    %v155 = vunpack.c.l.b16 %v68
    %v156 = vunpack.c.l.b16 %v69
    %v157 = vunpack.c.l.b16 %v70
    %v158 = vunpack.c.l.b16 %v71
    %v159 = vunpack.c.l.b16 %v72
    %v160 = vunpack.c.l.b16 %v73
    %v161 = vunpack.c.l.b16 %v74
    %v162 = vunpack.c.l.b16 %v75
    %v163 = vpack.c.b16 %v148, %v147
    %v164 = vpack.c.b16 %v150, %v149
    %v165 = vpack.c.b16 %v152, %v151
    %v166 = vpack.c.b16 %v154, %v153
    %v167 = vpack.c.b16 %v156, %v155
    %v168 = vpack.c.b16 %v158, %v157
    %v169 = vpack.c.b16 %v160, %v159
    %v170 = vpack.c.b16 %v162, %v161
    %179 = vmatprep.subr.bf16.mxu0 0
    %180 = vmatpush1.bf16.msra.mxu0 %v163
    %181 = vmatprep.subr.bf16.mxu0 0
    %182 = vmatpush1.bf16.msra.mxu0 %v164
    %183 = vmatprep.subr.bf16.mxu0 0
    %184 = vmatpush1.bf16.msra.mxu0 %v165
    %185 = vmatprep.subr.bf16.mxu0 0
    %186 = vmatpush1.bf16.msra.mxu0 %v166
    %187 = vmatprep.subr.bf16.mxu0 0
    %188 = vmatpush1.bf16.msra.mxu0 %v167
    %189 = vmatprep.subr.bf16.mxu0 0
    %190 = vmatpush1.bf16.msra.mxu0 %v168
    %191 = vmatprep.subr.bf16.mxu0 0
    %192 = vmatpush1.bf16.msra.mxu0 %v169
    %193 = vmatprep.subr.bf16.mxu0 0
    %194 = vmatpush1.bf16.msra.mxu0 %v170
    %195 = vmatprep.subr.bf16.mxu0 0
    %196 = vmatpush1.bf16.msra.mxu0 0
    %197 = vmatprep.subr.bf16.mxu0 0
    %198 = vmatpush1.bf16.msra.mxu0 0
    %199 = vmatprep.subr.bf16.mxu0 0
    %200 = vmatpush1.bf16.msra.mxu0 0
    %201 = vmatprep.subr.bf16.mxu0 0
    %202 = vmatpush1.bf16.msra.mxu0 0
    %203 = vmatprep.subr.bf16.mxu0 0
    %204 = vmatpush1.bf16.msra.mxu0 0
    %205 = vmatprep.subr.bf16.mxu0 0
    %206 = vmatpush1.bf16.msra.mxu0 0
    %207 = vmatprep.subr.bf16.mxu0 0
    %208 = vmatpush1.bf16.msra.mxu0 0
    %209 = vmatprep.subr.bf16.mxu0 0
    %210 = vmatpush1.bf16.msra.mxu0 0
    %211 = vmatprep.mubr.bf16.mxu0 0
    %212 = vmatmul.mubr.bf16.gmra.mrb[0].mxu0 %v115
    %v213 = vpop.f32.mrb[0].mxu0
    %v214 = vadd.f32 %v81, %v213
    %v215 = vpop.f32.mrb[0].mxu0
    %v216 = vpop.f32.mrb[0].mxu0
    %v217 = vadd.f32 %v81, %v216
    %v218 = vpop.f32.mrb[0].mxu0
    %219 = vmatprep.mubr.bf16.mxu0 0
    %220 = vmatmul.mubr.bf16.gmra.mrb[0].mxu0 %v116
    %v221 = vpop.f32.mrb[0].mxu0
    %v222 = vadd.f32 %v81, %v221
    %v223 = vpop.f32.mrb[0].mxu0
    %v224 = vpop.f32.mrb[0].mxu0
    %v225 = vadd.f32 %v81, %v224
    %v226 = vpop.f32.mrb[0].mxu0
    %227 = vmatprep.mubr.bf16.mxu0 0
    %228 = vmatmul.mubr.bf16.gmra.mrb[0].mxu0 %v117
    %v229 = vpop.f32.mrb[0].mxu0
    %v230 = vadd.f32 %v81, %v229
    %v231 = vpop.f32.mrb[0].mxu0
    %v232 = vpop.f32.mrb[0].mxu0
    %v233 = vadd.f32 %v81, %v232
    %v234 = vpop.f32.mrb[0].mxu0
    %235 = vmatprep.mubr.bf16.mxu0 0
    %236 = vmatmul.mubr.bf16.gmra.mrb[0].mxu0 %v118
    %v237 = vpop.f32.mrb[0].mxu0
    %v238 = vadd.f32 %v81, %v237
    %v239 = vpop.f32.mrb[0].mxu0
    %v240 = vpop.f32.mrb[0].mxu0
    %v241 = vadd.f32 %v81, %v240
    %v242 = vpop.f32.mrb[0].mxu0
    %243 = vmatprep.mubr.bf16.mxu0 0
    %244 = vmatmul.mubr.bf16.gmra.mrb[0].mxu0 %v119
    %v245 = vpop.f32.mrb[0].mxu0
    %v246 = vadd.f32 %v81, %v245
    %v247 = vpop.f32.mrb[0].mxu0
    %v248 = vpop.f32.mrb[0].mxu0
    %v249 = vadd.f32 %v81, %v248
    %v250 = vpop.f32.mrb[0].mxu0
    %251 = vmatprep.mubr.bf16.mxu0 0
    %252 = vmatmul.mubr.bf16.gmra.mrb[0].mxu0 %v120
    %v253 = vpop.f32.mrb[0].mxu0
    %v254 = vadd.f32 %v81, %v253
    %v255 = vpop.f32.mrb[0].mxu0
    %v256 = vpop.f32.mrb[0].mxu0
    %v257 = vadd.f32 %v81, %v256
    %v258 = vpop.f32.mrb[0].mxu0
    %259 = vmatprep.mubr.bf16.mxu0 0
    %260 = vmatmul.mubr.bf16.gmra.mrb[0].mxu0 %v121
    %v261 = vpop.f32.mrb[0].mxu0
    %v262 = vadd.f32 %v81, %v261
    %v263 = vpop.f32.mrb[0].mxu0
    %v264 = vpop.f32.mrb[0].mxu0
    %v265 = vadd.f32 %v81, %v264
    %v266 = vpop.f32.mrb[0].mxu0
    %267 = vmatprep.mubr.bf16.mxu0 0
    %268 = vmatmul.mubr.bf16.gmra.mrb[0].mxu0 %v122
    %v269 = vpop.f32.mrb[0].mxu0
    %v270 = vadd.f32 %v81, %v269
    %v271 = vpop.f32.mrb[0].mxu0
    %v272 = vpop.f32.mrb[0].mxu0
    %v273 = vadd.f32 %v81, %v272
    %v274 = vpop.f32.mrb[0].mxu0
    %275 = vdwg.mxu0
    %vm276 = vcmp.ge.f32.partialorder %v214, 0.0
    %vm277 = vcmp.ge.f32.partialorder %v217, 0.0
    %vm278 = vcmp.ge.f32.partialorder %v222, 0.0
    %vm279 = vcmp.ge.f32.partialorder %v225, 0.0
    %vm280 = vcmp.ge.f32.partialorder %v230, 0.0
    %vm281 = vcmp.ge.f32.partialorder %v233, 0.0
    %vm282 = vcmp.ge.f32.partialorder %v238, 0.0
    %vm283 = vcmp.ge.f32.partialorder %v241, 0.0
    %vm284 = vcmp.ge.f32.partialorder %v246, 0.0
    %vm285 = vcmp.ge.f32.partialorder %v249, 0.0
    %vm286 = vcmp.ge.f32.partialorder %v254, 0.0
    %vm287 = vcmp.ge.f32.partialorder %v257, 0.0
    %vm288 = vcmp.ge.f32.partialorder %v262, 0.0
    %vm289 = vcmp.ge.f32.partialorder %v265, 0.0
    %vm290 = vcmp.ge.f32.partialorder %v270, 0.0
    %vm291 = vcmp.ge.f32.partialorder %v273, 0.0
    %v292 = vmul.f32 %v214, 0.01
    %v293 = vmul.f32 %v217, 0.01
    %v294 = vmul.f32 %v222, 0.01
    %v295 = vmul.f32 %v225, 0.01
    %v296 = vmul.f32 %v230, 0.01
    %v297 = vmul.f32 %v233, 0.01
    %v298 = vmul.f32 %v238, 0.01
    %v299 = vmul.f32 %v241, 0.01
    %v300 = vmul.f32 %v246, 0.01
    %v301 = vmul.f32 %v249, 0.01
    %v302 = vmul.f32 %v254, 0.01
    %v303 = vmul.f32 %v257, 0.01
    %v304 = vmul.f32 %v262, 0.01
    %v305 = vmul.f32 %v265, 0.01
    %v306 = vmul.f32 %v270, 0.01
    %v307 = vmul.f32 %v273, 0.01
    %v308 = vsel %vm276, %v214, %v292
    %v309 = vsel %vm277, %v217, %v293
    %v310 = vsel %vm278, %v222, %v294
    %v311 = vsel %vm279, %v225, %v295
    %v312 = vsel %vm280, %v230, %v296
    %v313 = vsel %vm281, %v233, %v297
    %v314 = vsel %vm282, %v238, %v298
    %v315 = vsel %vm283, %v241, %v299
    %v316 = vsel %vm284, %v246, %v300
    %v317 = vsel %vm285, %v249, %v301
    %v318 = vsel %vm286, %v254, %v302
    %v319 = vsel %vm287, %v257, %v303
    %v320 = vsel %vm288, %v262, %v304
    %v321 = vsel %vm289, %v265, %v305
    %v322 = vsel %vm290, %v270, %v306
    %v323 = vsel %vm291, %v273, %v307
    %324 = vst [vmem:[#allocation7] sm:$0xff] %v308
    %325 = vst [vmem:[#allocation7 + $0x8] sm:$0xff] %v309
    %326 = vst [vmem:[#allocation7 + $0x10] sm:$0xff] %v310
    %327 = vst [vmem:[#allocation7 + $0x18] sm:$0xff] %v311
    %328 = vst [vmem:[#allocation7 + $0x20] sm:$0xff] %v312
    %329 = vst [vmem:[#allocation7 + $0x28] sm:$0xff] %v313
    %330 = vst [vmem:[#allocation7 + $0x30] sm:$0xff] %v314
    %331 = vst [vmem:[#allocation7 + $0x38] sm:$0xff] %v315
    %332 = vst [vmem:[#allocation7 + $0x40] sm:$0xff] %v316
    %333 = vst [vmem:[#allocation7 + $0x48] sm:$0xff] %v317
    %334 = vst [vmem:[#allocation7 + $0x50] sm:$0xff] %v318
    %335 = vst [vmem:[#allocation7 + $0x58] sm:$0xff] %v319
    %336 = vst [vmem:[#allocation7 + $0x60] sm:$0xff] %v320
    %337 = vst [vmem:[#allocation7 + $0x68] sm:$0xff] %v321
    %338 = vst [vmem:[#allocation7 + $0x70] sm:$0xff] %v322
    %339 = vst [vmem:[#allocation7 + $0x78] sm:$0xff] %v323
    // Predicated region
    $region22: #{tpu_custom_call.1} parent=1 // pred_check
      _
    $region23: #{tpu_custom_call.1} parent=1 // pred_check_branch
      %341 = sbr.rel (0) target = $region25
    $region24: #{tpu_custom_call.1} parent=1 // pred_region
      %s343 = ssub.s32 2048, 2048
      %344 = vsyncadd [#allocation4], %s343
      %s345 = sshll.u32 [#allocation7], 4
      %s346 = int_to_ptr.vmem [resolvable:$true] %s345
      %351 = dma.vmem_to_hbm [thread:$0]  %s346, 2048, %s3, [#allocation4], 128, 128, 8
    $region25: #{tpu_custom_call.1} parent=1 // pred_fallthru
      _
    // Predicated region
    $region26: #{tpu_custom_call.1} parent=1 // pred_check
      _
    $region27: #{tpu_custom_call.1} parent=1 // pred_check_branch
      %353 = sbr.rel (0) target = $region29
    $region28: #{tpu_custom_call.1} parent=1 // pred_region
      %354 = dma.done [#allocation4], 2048
    $region29: #{tpu_custom_call.1} parent=1 // pred_fallthru
      _
    %355 = vsyncpa [#allocation3], 1
    %356 = vsyncpa [#allocation6], 1
    %357 = vsyncpa [#allocation4], 1

</llo_original>
